<compile_context>
chip_gen: v5e
topology: v5e:2x2
jax: 0.10.0
libtpu: 0.0.40
codegen_flags: <defaults>
</compile_context>

<pallas_src>
import functools

import jax
import jax.numpy as jnp
from jax.experimental import pallas as pl
from jax.experimental.pallas import tpu as pltpu

LANE = 128


# ----------------------------- small helpers ---------------------------------

def _round_up(x, m):
    return (x + m - 1) // m * m


def _pad_last(x, target):
    pad = target - x.shape[-1]
    if pad == 0:
        return x
    cfg = [(0, 0)] * (x.ndim - 1) + [(0, pad)]
    return jnp.pad(x, cfg)


def _choose_tile(hw, max_tile=1024):
    """Largest multiple-of-8 divisor of hw that is <= max_tile (else hw itself)."""
    if hw <= max_tile:
        return hw
    best = hw
    t = 8
    while t <= max_tile:
        if hw % t == 0:
            best = t
        t += 8
    return best


def _fold_bn(bn, cout_p, eps):
    """gamma/sqrt(var+eps), beta - mean*scale, padded to cout_p, f32, shape (1, cout_p)."""
    gamma, beta, mean, var = bn["gamma"], bn["beta"], bn["mean"], bn["var"]
    inv = 1.0 / jnp.sqrt(var + eps)
    scale = gamma * inv
    bias = beta - mean * scale
    cout = scale.shape[0]
    scale = jnp.pad(scale, (0, cout_p - cout)).reshape(1, cout_p).astype(jnp.float32)
    bias = jnp.pad(bias, (0, cout_p - cout)).reshape(1, cout_p).astype(jnp.float32)
    return scale, bias


def _prep_w1x1(w_oihw, cin_p, cout_p, dtype):
    cout, cin = w_oihw.shape[:2]
    w = jnp.transpose(w_oihw[:, :, 0, 0], (1, 0))            # (Cin, Cout)
    w = jnp.pad(w, ((0, cin_p - cin), (0, cout_p - cout)))
    return w.astype(dtype)


def _prep_w3x3_patch(w_oihw, k_pad, cout_p, dtype):
    """(Cout, Cin, 3, 3) -> (k_pad, cout_p) with tap-major-then-Cin row order."""
    cout, cin, kh, kw = w_oihw.shape
    w = jnp.transpose(w_oihw, (2, 3, 1, 0)).reshape(kh * kw * cin, cout)
    w = jnp.pad(w, ((0, k_pad - kh * kw * cin), (0, cout_p - cout)))
    return w.astype(dtype)


def _extract_patches_3x3(x_nhwc, stride):
    """Form the 9 shifted/strided taps (pad=1) in plain JAX.

    x_nhwc: (N, H, W, C) with *unpadded* channel count.
    Returns (N, Ho*Wo, 9*C), Ho, Wo.  Tap order = (ky, kx) row-major, matching
    the weight layout produced by _prep_w3x3_patch.
    """
    n, h, w, c = x_nhwc.shape
    ho = (h + 2 - 3) // stride + 1
    wo = (w + 2 - 3) // stride + 1
    xp = jnp.pad(x_nhwc, ((0, 0), (1, 1), (1, 1), (0, 0)))
    taps = []
    for ky in range(3):
        for kx in range(3):
            t = jax.lax.slice(
                xp,
                (0, ky, kx, 0),
                (n, ky + (ho - 1) * stride + 1, kx + (wo - 1) * stride + 1, c),
                (1, stride, stride, 1))
            taps.append(t)
    patches = jnp.concatenate(taps, axis=-1)                  # (N, Ho, Wo, 9*C)
    return patches.reshape(n, ho * wo, 9 * c), ho, wo


# ----------------------------- kernel ------------------------------------------

def _matmul_bn_act_kernel(*refs, apply_relu, shortcut, dual_output):
    """matmul + BN (+ fused 1x1 shortcut conv/BN or identity residual) (+ ReLU).

    inputs : x (1,T,K_p) bf16, w (K_p,Cout_p) bf16, scale/bias (1,Cout_p) f32
             [residual (1,T,Cres_p) bf16]
             [sc_w (Cres_p,Cout_p) bf16, sc_scale/sc_bias (1,Cout_p) f32]
    outputs: out (1,T,Cout_p) [, preact (1,T,Cout_p) f32 if dual_output]
    """
    it = iter(refs)
    x_ref = next(it)
    w_ref = next(it)
    scale_ref = next(it)
    bias_ref = next(it)
    r_ref = next(it) if shortcut != "none" else None
    if shortcut == "conv":
        wsc_ref = next(it)
        ssc_ref = next(it)
        bsc_ref = next(it)
    out_ref = next(it)
    preact_ref = next(it) if dual_output else None

    # bf16 matmul on the MXU, f32 accumulation; BN folded into scale/bias.
    y = jnp.dot(x_ref[0], w_ref[...], preferred_element_type=jnp.float32)
    y = y * scale_ref[...] + bias_ref[...]

    if shortcut == "conv":
        sc = jnp.dot(r_ref[0], wsc_ref[...], preferred_element_type=jnp.float32)
        y = y + (sc * ssc_ref[...] + bsc_ref[...])
    elif shortcut == "identity":
        y = y + r_ref[0].astype(jnp.float32)

    if dual_output:
        preact_ref[0] = y.astype(preact_ref.dtype)
    if apply_relu:
        y = jnp.maximum(y, 0.0)
    out_ref[0] = y.astype(out_ref.dtype)


# ----------------------------- pallas_call wrapper -----------------------------

def matmul_bn_act(x, w, scale, bias, *, apply_relu,
                  residual=None, sc_w=None, sc_scale=None, sc_bias=None,
                  dual_output=False, out_dtype=jnp.bfloat16, max_tile_hw=1024):
    """x: (N, HW, K_p) bf16; w: (K_p, Cout_p) bf16; scale/bias: (1, Cout_p) f32."""
    n, hw, k_p = x.shape
    cout_p = w.shape[1]
    tile = _choose_tile(hw, max_tile_hw)
    grid = (n, hw // tile)

    shortcut = "none"
    if residual is not None:
        shortcut = "conv" if sc_w is not None else "identity"

    in_specs = [
        pl.BlockSpec((1, tile, k_p), lambda i, j: (i, j, 0)),
        pl.BlockSpec((k_p, cout_p), lambda i, j: (0, 0)),
        pl.BlockSpec((1, cout_p), lambda i, j: (0, 0)),
        pl.BlockSpec((1, cout_p), lambda i, j: (0, 0)),
    ]
    args = [x, w, scale, bias]

    if shortcut != "none":
        cres_p = residual.shape[-1]
        in_specs.append(pl.BlockSpec((1, tile, cres_p), lambda i, j: (i, j, 0)))
        args.append(residual)
    if shortcut == "conv":
        in_specs += [
            pl.BlockSpec((cres_p, cout_p), lambda i, j: (0, 0)),
            pl.BlockSpec((1, cout_p), lambda i, j: (0, 0)),
            pl.BlockSpec((1, cout_p), lambda i, j: (0, 0)),
        ]
        args += [sc_w, sc_scale, sc_bias]

    if dual_output:
        out_shape = (jax.ShapeDtypeStruct((n, hw, cout_p), out_dtype),
                     jax.ShapeDtypeStruct((n, hw, cout_p), jnp.float32))
        out_specs = (pl.BlockSpec((1, tile, cout_p), lambda i, j: (i, j, 0)),
                     pl.BlockSpec((1, tile, cout_p), lambda i, j: (i, j, 0)))
    else:
        out_shape = jax.ShapeDtypeStruct((n, hw, cout_p), out_dtype)
        out_specs = pl.BlockSpec((1, tile, cout_p), lambda i, j: (i, j, 0))

    kernel = functools.partial(_matmul_bn_act_kernel, apply_relu=apply_relu,
                               shortcut=shortcut, dual_output=dual_output)
    return pl.pallas_call(
        kernel,
        grid=grid,
        in_specs=in_specs,
        out_specs=out_specs,
        out_shape=out_shape,
        compiler_params=pltpu.CompilerParams(
            dimension_semantics=("parallel", "parallel")),
    )(*args)


# ----------------------------- Bottleneck forward ------------------------------

def bottleneck_forward(x_nchw, params, *, stride, is_last,
                       compute_dtype=jnp.bfloat16, eps=1e-5):
    """Pallas implementation of Bottleneck.forward. Input/output are NCHW f32."""
    n, cin, h, w = x_nchw.shape
    planes = params["conv1_w"].shape[0]
    cout = params["conv3_w"].shape[0]          # expansion * planes

    cin_p = _round_up(cin, LANE)
    pln_p = _round_up(planes, LANE)
    cout_p = _round_up(cout, LANE)

    # NCHW -> NHWC, lane-pad channels, cast activations to bf16 (compute dtype).
    x_nhwc = jnp.transpose(x_nchw, (0, 2, 3, 1))
    x_p = _pad_last(x_nhwc, cin_p).astype(compute_dtype)

    # conv1 (1x1) + bn1 + relu
    w1 = _prep_w1x1(params["conv1_w"], cin_p, pln_p, compute_dtype)
    s1, b1 = _fold_bn(params["bn1"], pln_p, eps)
    h1 = matmul_bn_act(x_p.reshape(n, h * w, cin_p), w1, s1, b1,
                       apply_relu=True, out_dtype=compute_dtype)

    # conv2 (3x3, stride, pad=1) + bn2 + relu:
    # form the 9 taps in the wrapper (unpadded channels), single MXU matmul inside.
    h1_nhwc = h1.reshape(n, h, w, pln_p)[..., :planes]
    patches, ho, wo = _extract_patches_3x3(h1_nhwc, stride)   # (N, Ho*Wo, 9*planes)
    k_pad = _round_up(9 * planes, LANE)
    patches = _pad_last(patches, k_pad).astype(compute_dtype)
    w2 = _prep_w3x3_patch(params["conv2_w"], k_pad, pln_p, compute_dtype)
    s2, b2 = _fold_bn(params["bn2"], pln_p, eps)
    h2 = matmul_bn_act(patches, w2, s2, b2, apply_relu=True,
                       out_dtype=compute_dtype)

    # conv3 (1x1) + bn3 + shortcut (fused) + residual add + relu (+ preact if is_last)
    w3 = _prep_w1x1(params["conv3_w"], pln_p, cout_p, compute_dtype)
    s3, b3 = _fold_bn(params["bn3"], cout_p, eps)

    if "sc_w" in params:
        x_strided = x_p[:, ::stride, ::stride, :].reshape(n, ho * wo, cin_p)
        wsc = _prep_w1x1(params["sc_w"], cin_p, cout_p, compute_dtype)
        ssc, bsc = _fold_bn(params["bn_sc"], cout_p, eps)
        result = matmul_bn_act(
            h2, w3, s3, b3, apply_relu=True, residual=x_strided,
            sc_w=wsc, sc_scale=ssc, sc_bias=bsc,
            dual_output=is_last, out_dtype=jnp.float32)
    else:
        # identity shortcut (stride == 1 and cin == expansion*planes)
        residual = x_p.reshape(n, h * w, cin_p)
        result = matmul_bn_act(
            h2, w3, s3, b3, apply_relu=True, residual=residual,
            dual_output=is_last, out_dtype=jnp.float32)

    def _to_nchw(a):
        return jnp.transpose(a.reshape(n, ho, wo, cout_p)[..., :cout], (0, 3, 1, 2))

    if is_last:
        out, preact = result
        return _to_nchw(out), _to_nchw(preact)
    return _to_nchw(result)


# ----------------------------- reference (plain JAX, f32) ----------------------

def _bn_ref(x_nchw, bn, eps=1e-5):
    g = bn["gamma"][None, :, None, None]
    b = bn["beta"][None, :, None, None]
    m = bn["mean"][None, :, None, None]
    v = bn["var"][None, :, None, None]
    return (x_nchw - m) / jnp.sqrt(v + eps) * g + b


def _conv_ref(x_nchw, w_oihw, stride, padding):
    return jax.lax.conv_general_dilated(
        x_nchw, w_oihw, window_strides=(stride, stride),
        padding=((padding, padding), (padding, padding)),
        dimension_numbers=("NCHW", "OIHW", "NCHW"))


def bottleneck_reference(x_nchw, params, *, stride, is_last):
    out = jax.nn.relu(_bn_ref(_conv_ref(x_nchw, params["conv1_w"], 1, 0), params["bn1"]))
    out = jax.nn.relu(_bn_ref(_conv_ref(out, params["conv2_w"], stride, 1), params["bn2"]))
    out = _bn_ref(_conv_ref(out, params["conv3_w"], 1, 0), params["bn3"])
    if "sc_w" in params:
        sc = _bn_ref(_conv_ref(x_nchw, params["sc_w"], stride, 0), params["bn_sc"])
    else:
        sc = x_nchw
    out = out + sc
    preact = out
    out = jax.nn.relu(out)
    if is_last:
        return out, preact
    return out


# ----------------------------- parameter init ----------------------------------

def _init_bn(key, planes):
    k1, k2, k3, k4 = jax.random.split(key, 4)
    return dict(
        gamma=(1.0 + 0.1 * jax.random.normal(k1, (planes,))).astype(jnp.float32),
        beta=(0.1 * jax.random.normal(k2, (planes,))).astype(jnp.float32),
        mean=(0.05 * jax.random.normal(k3, (planes,))).astype(jnp.float32),
        var=jnp.abs(1.0 + 0.1 * jax.random.normal(k4, (planes,))).astype(jnp.float32),
    )


def init_bottleneck(key, in_planes, planes, stride):
    expansion = 4
    keys = jax.random.split(key, 8)
    params = {
        "conv1_w": (0.1 * jax.random.normal(keys[0], (planes, in_planes, 1, 1))
                    ).astype(jnp.float32),
        "bn1": _init_bn(keys[1], planes),
        "conv2_w": (0.1 * jax.random.normal(keys[2], (planes, planes, 3, 3))
                    ).astype(jnp.float32),
        "bn2": _init_bn(keys[3], planes),
        "conv3_w": (0.1 * jax.random.normal(keys[4], (expansion * planes, planes, 1, 1))
                    ).astype(jnp.float32),
        "bn3": _init_bn(keys[5], expansion * planes),
    }
    if stride != 1 or in_planes != expansion * planes:
        params["sc_w"] = (0.1 * jax.random.normal(
            keys[6], (expansion * planes, in_planes, 1, 1))).astype(jnp.float32)
        params["bn_sc"] = _init_bn(keys[7], expansion * planes)
    return params


# ----------------------------- test ---------------------------------------------

if __name__ == "__main__":
    key = jax.random.PRNGKey(0)
    TOL = dict(atol=5e-2, rtol=5e-2)   # bf16 matmul inputs vs f32 reference

    # Config A: strided block with 1x1 conv shortcut, is_last=True (dual output).
    k_x, k_p, key = jax.random.split(key, 3)
    in_planes, planes, stride, is_last = 4, 4, 2, True
    x = jax.random.normal(k_x, (2, in_planes, 16, 16), jnp.float32)   # NCHW
    params = init_bottleneck(k_p, in_planes, planes, stride)

    out, preact = bottleneck_forward(x, params, stride=stride, is_last=is_last)
    out, preact = jax.block_until_ready((out, preact))
    out_ref, preact_ref = bottleneck_reference(x, params, stride=stride, is_last=is_last)
    assert out.shape == out_ref.shape and preact.shape == preact_ref.shape
    assert jnp.allclose(out, out_ref, **TOL)
    assert jnp.allclose(preact, preact_ref, **TOL)

    # Config B: identity shortcut (stride=1, in_planes == 4*planes), is_last=False.
    k_x2, k_p2, key = jax.random.split(key, 3)
    in_planes2, planes2, stride2, is_last2 = 16, 4, 1, False
    x2 = jax.random.normal(k_x2, (2, in_planes2, 8, 8), jnp.float32)  # NCHW
    params2 = init_bottleneck(k_p2, in_planes2, planes2, stride2)

    out2 = bottleneck_forward(x2, params2, stride=stride2, is_last=is_last2)
    out2 = jax.block_until_ready(out2)
    out2_ref = bottleneck_reference(x2, params2, stride=stride2, is_last=is_last2)
    assert out2.shape == out2_ref.shape
    assert jnp.allclose(out2, out2_ref, **TOL)

    print("KERNEL_OK")
</pallas_src>

<mosaic_0001>
module attributes {stable_mosaic.version = 11 : i64} {
  func.func @_matmul_bn_act_kernel(%arg0: i32, %arg1: i32, %arg2: memref<1x256x128xbf16, #tpu.memory_space<vmem>>, %arg3: memref<128x128xbf16, #tpu.memory_space<vmem>>, %arg4: memref<1x128xf32, #tpu.memory_space<vmem>>, %arg5: memref<1x128xf32, #tpu.memory_space<vmem>>, %arg6: memref<1x256x128xbf16, #tpu.memory_space<vmem>>) attributes {dimension_semantics = [#tpu.dimension_semantics<parallel>, #tpu.dimension_semantics<parallel>], iteration_bounds = array<i64: 2, 1>, scalar_prefetch = 0 : i64, scratch_operands = 0 : i64, tpu.core_type = #tpu.core_type<tc>, window_params = [{transform_indices = @transform_0, window_bounds = array<i64: 1, 256, 128>}, {pipeline_mode = #tpu.pipeline_mode<synchronous>, transform_indices = @transform_1, window_bounds = array<i64: 128, 128>}, {pipeline_mode = #tpu.pipeline_mode<synchronous>, transform_indices = @transform_2, window_bounds = array<i64: 1, 128>}, {pipeline_mode = #tpu.pipeline_mode<synchronous>, transform_indices = @transform_3, window_bounds = array<i64: 1, 128>}, {transform_indices = @transform_4, window_bounds = array<i64: 1, 256, 128>}]} {
    %c0 = arith.constant 0 : index
    %c0_0 = arith.constant 0 : index
    %c0_1 = arith.constant 0 : index
    %0 = vector.load %arg2[%c0, %c0_0, %c0_1] : memref<1x256x128xbf16, #tpu.memory_space<vmem>>, vector<1x256x128xbf16>
    %1 = vector.shape_cast %0 : vector<1x256x128xbf16> to vector<256x128xbf16>
    %c0_2 = arith.constant 0 : index
    %c0_3 = arith.constant 0 : index
    %2 = vector.load %arg3[%c0_2, %c0_3] : memref<128x128xbf16, #tpu.memory_space<vmem>>, vector<128x128xbf16>
    %cst = arith.constant dense<0.000000e+00> : vector<256x128xf32>
    %3 = tpu.matmul %1, %2, %cst {dimension_numbers = #tpu.dot_dimension_numbers<[1], [0], [0], [1], [0, 0, 1, 1], [], []>} : vector<256x128xbf16>, vector<128x128xbf16>, vector<256x128xf32> -> vector<256x128xf32>
    %c0_4 = arith.constant 0 : index
    %c0_5 = arith.constant 0 : index
    %4 = vector.load %arg4[%c0_4, %c0_5] : memref<1x128xf32, #tpu.memory_space<vmem>>, vector<1x128xf32>
    %5 = vector.broadcast %4 : vector<1x128xf32> to vector<256x128xf32>
    %6 = arith.mulf %3, %5 : vector<256x128xf32>
    %c0_6 = arith.constant 0 : index
    %c0_7 = arith.constant 0 : index
    %7 = vector.load %arg5[%c0_6, %c0_7] : memref<1x128xf32, #tpu.memory_space<vmem>>, vector<1x128xf32>
    %8 = vector.broadcast %7 : vector<1x128xf32> to vector<256x128xf32>
    %9 = arith.addf %6, %8 : vector<256x128xf32>
    %cst_8 = arith.constant 0.000000e+00 : f32
    %10 = vector.broadcast %cst_8 : f32 to vector<256x128xf32>
    %11 = arith.maximumf %9, %10 : vector<256x128xf32>
    %12 = arith.truncf %11 : vector<256x128xf32> to vector<256x128xbf16>
    %c0_9 = arith.constant 0 : index
    %c0_10 = arith.constant 0 : index
    %c0_11 = arith.constant 0 : index
    %13 = vector.load %arg6[%c0_9, %c0_10, %c0_11] : memref<1x256x128xbf16, #tpu.memory_space<vmem>>, vector<1x256x128xbf16>
    %14 = vector.shape_cast %13 : vector<1x256x128xbf16> to vector<256x128xbf16>
    %15 = vector.shape_cast %12 : vector<256x128xbf16> to vector<1x256x128xbf16>
    tpu.vector_store %arg6[%c0_9, %c0_10, %c0_11], %15 {strides = array<i32>} : memref<1x256x128xbf16, #tpu.memory_space<vmem>>, vector<1x256x128xbf16>,
    return
  }
  func.func @transform_0(%arg0: i32, %arg1: i32) -> (i32, i32, i32) {
    %c0_i32 = arith.constant 0 : i32
    %c0_i32_0 = arith.constant 0 : i32
    return %arg0, %arg1, %c0_i32 : i32, i32, i32
  }
  func.func @transform_1(%arg0: i32, %arg1: i32) -> (i32, i32) {
    %c0_i32 = arith.constant 0 : i32
    %c0_i32_0 = arith.constant 0 : i32
    %c0_i32_1 = arith.constant 0 : i32
    return %c0_i32, %c0_i32_0 : i32, i32
  }
  func.func @transform_2(%arg0: i32, %arg1: i32) -> (i32, i32) {
    %c0_i32 = arith.constant 0 : i32
    %c0_i32_0 = arith.constant 0 : i32
    %c0_i32_1 = arith.constant 0 : i32
    return %c0_i32, %c0_i32_0 : i32, i32
  }
  func.func @transform_3(%arg0: i32, %arg1: i32) -> (i32, i32) {
    %c0_i32 = arith.constant 0 : i32
    %c0_i32_0 = arith.constant 0 : i32
    %c0_i32_1 = arith.constant 0 : i32
    return %c0_i32, %c0_i32_0 : i32, i32
  }
  func.func @transform_4(%arg0: i32, %arg1: i32) -> (i32, i32, i32) {
    %c0_i32 = arith.constant 0 : i32
    %c0_i32_0 = arith.constant 0 : i32
    return %arg0, %arg1, %c0_i32 : i32, i32, i32
  }
}

</mosaic_0001>

<llo_original>
// kernel: tpu_custom_call.1
$region0: #{tpu_custom_call.1}
  #allocation0 [shape = 'u32[]', space=smem, size = 0x4, offset = 0x4, fixed_abs, tag = 'smem constant byte address 0x4 - core index']
  #allocation1 [shape = 'u32[72,128]{1,0:T(1,128)}', space=vmem, size = 0x9000, scoped, tag = 'internal scratch']
  %s0 = inlined_call_operand.hbm [shape: bf16[2,256,128], index: 0, kind: input, shape index: {}]
  %s1 = inlined_call_operand.hbm [shape: bf16[128,128], index: 1, kind: input, shape index: {}]
  %s2 = inlined_call_operand.vmem [shape: f32[1,128], index: 2, kind: input, shape index: {}]
  %s3 = inlined_call_operand.vmem [shape: f32[1,128], index: 3, kind: input, shape index: {}]
  %s4 = inlined_call_operand.hbm [shape: bf16[2,256,128], index: 4, kind: output, shape index: {}]
  %s5 = sld [smem:[#allocation0]]
  $region57: #{tpu_custom_call.1} parent=0
    _
  %s7 = ssub.s32 1, %s5
  %s8 = scalar_select 0, %s7, %s5
  $region1: #{tpu_custom_call.1} parent=0
    #allocation2 [shape = 'u8[131072]{0}', space=vmem, size = 0x20000, scoped, tag = 'input window, operand 0']
    #allocation3 [shape = 's32[2]{0}', space=sflag, size = 0x8, scoped, tag = 'scoped memory for tpu_custom_call.1']
    #allocation4 [shape = 's32[2]{0}', space=sflag, size = 0x8, scoped, tag = 'scoped memory for tpu_custom_call.1']
    #allocation5 [shape = 'u8[32768]{0}', space=vmem, size = 0x8000, scoped, tag = 'input window, operand 1, single buffered']
    #allocation6 [shape = 's32[1]{0}', space=sflag, size = 0x4, scoped, tag = 'scoped memory for tpu_custom_call.1']
    #allocation7 [shape = 'u8[131072]{0}', space=vmem, size = 0x20000, scoped, tag = 'output window, operand 0']
    %9 = vsyncpa [#allocation3], 0
    %s10 = scalar_lea.sflag [#allocation3], 1
    %11 = vsyncpa %s10, 0
    %12 = vsyncpa [#allocation6], 0
    %13 = vsyncpa [#allocation4], 0
    %s14 = scalar_lea.sflag [#allocation4], 1
    %15 = vsyncpa %s14, 0
    loop: start=0, step=1, limit=4
    $region2: #{tpu_custom_call.1} parent=1 // loop_pre_header
      _
    $region3: #{tpu_custom_call.1} parent=1 // loop_header
      %s17 = sphi 0, %s21
      %p18 = scmp.ge.s32.totalorder %s17, 4
      %s24 = sphi 0, %s36
      %s25 = sphi 0, %s32
      %s26 = sphi 0, %s24
      %s27 = sphi 0, %s25
      %s28 = sphi 0, %s26
      %s29 = sphi 0, %s27
      %s41 = sphi 0, %s43
      %s44 = sphi 0, %s41
      %s45 = sphi 0, %s44
      %s61 = sphi 0, %s45
      %s65 = sphi 0, %s65
      %s67 = sphi 0, %s65
      %s68 = sphi 0, %s67
      %s82 = sphi 0, %s68
      %s86 = sphi 0, %s86
      %s88 = sphi 0, %s86
      %s89 = sphi 0, %s88
      %s103 = sphi 0, %s89
      %s107 = sphi 0, %s107
      %s109 = sphi 0, %s107
      %s110 = sphi 0, %s109
      %s124 = sphi 0, %s110
      %s132 = sphi 0, %s134
      %s135 = sphi 0, %s132
      %s136 = sphi 0, %s135
      %s152 = sphi 0, %s136
    $region4: #{tpu_custom_call.1} parent=1 // loop_header_branch
      %20 = sbr.rel (%p18) target = $region8
    $region5: #{tpu_custom_call.1} parent=1 // loop_body
      %s22 = ssub.s32 %s17, 1
      %s23 = ssub.s32 %s17, 2
      %s30 = sadd.s32 1, %s25
      %p31 = scmp.ge.s32.totalorder %s30, 1
      %s32 = scalar_select %p31, 0, %s30
      %s33 = sadd.s32 1, %s24
      %s34 = scalar_select %p31, %s33, %s24
      %p35 = scmp.ge.s32.totalorder %s34, 2
      %s36 = scalar_select %p35, 0, %s34
      %s37 = ssub.s32 %s24, %s36
      %s38 = ssub.s32 %s25, %s32
      %s39 = sor.u32 %s37, %s38
      %p40 = scmp.eq.s32.totalorder %s39, 0
      %s42 = sadd.s32 %s41, 1
      %s43 = scalar_select %p40, %s41, %s42
      %p46 = pneg %p40
      %p47 = scmp.eq.s32.totalorder %s17, 1
      %p48 = por %p46, %p47
      %p49 = scmp.ne.s32.totalorder %s41, %s44
      %p50 = scmp.eq.s32.totalorder %s17, 0
      %p51 = por %p49, %p50
      %p52 = scmp.ne.s32.totalorder %s41, %s44
      %p53 = scmp.eq.s32.totalorder %s22, 1
      %p54 = por %p52, %p53
      %p55 = scmp.ne.s32.totalorder %s44, %s45
      %p56 = scmp.eq.s32.totalorder %s22, 0
      %p57 = por %p55, %p56
      %p58 = scmp.ne.s32.totalorder %s44, %s45
      %p59 = scmp.eq.s32.totalorder %s23, 1
      %p60 = por %p58, %p59
      %p62 = scmp.ne.s32.totalorder %s45, %s61
      %p63 = scmp.eq.s32.totalorder %s23, 0
      %p64 = por %p62, %p63
      %s66 = sadd.s32 %s65, 1
      %p69 = scmp.eq.s32.totalorder %s17, 1
      %p70 = scmp.ne.s32.totalorder %s65, %s67
      %p71 = scmp.eq.s32.totalorder %s17, 0
      %p72 = por %p70, %p71
      %p73 = scmp.ne.s32.totalorder %s65, %s67
      %p74 = scmp.eq.s32.totalorder %s22, 1
      %p75 = por %p73, %p74
      %p76 = scmp.ne.s32.totalorder %s67, %s68
      %p77 = scmp.eq.s32.totalorder %s22, 0
      %p78 = por %p76, %p77
      %p79 = scmp.ne.s32.totalorder %s67, %s68
      %p80 = scmp.eq.s32.totalorder %s23, 1
      %p81 = por %p79, %p80
      %p83 = scmp.ne.s32.totalorder %s68, %s82
      %p84 = scmp.eq.s32.totalorder %s23, 0
      %p85 = por %p83, %p84
      %s87 = sadd.s32 %s86, 1
      %p90 = scmp.eq.s32.totalorder %s17, 1
      %p91 = scmp.ne.s32.totalorder %s86, %s88
      %p92 = scmp.eq.s32.totalorder %s17, 0
      %p93 = por %p91, %p92
      %p94 = scmp.ne.s32.totalorder %s86, %s88
      %p95 = scmp.eq.s32.totalorder %s22, 1
      %p96 = por %p94, %p95
      %p97 = scmp.ne.s32.totalorder %s88, %s89
      %p98 = scmp.eq.s32.totalorder %s22, 0
      %p99 = por %p97, %p98
      %p100 = scmp.ne.s32.totalorder %s88, %s89
      %p101 = scmp.eq.s32.totalorder %s23, 1
      %p102 = por %p100, %p101
      %p104 = scmp.ne.s32.totalorder %s89, %s103
      %p105 = scmp.eq.s32.totalorder %s23, 0
      %p106 = por %p104, %p105
      %s108 = sadd.s32 %s107, 1
      %p111 = scmp.eq.s32.totalorder %s17, 1
      %p112 = scmp.ne.s32.totalorder %s107, %s109
      %p113 = scmp.eq.s32.totalorder %s17, 0
      %p114 = por %p112, %p113
      %p115 = scmp.ne.s32.totalorder %s107, %s109
      %p116 = scmp.eq.s32.totalorder %s22, 1
      %p117 = por %p115, %p116
      %p118 = scmp.ne.s32.totalorder %s109, %s110
      %p119 = scmp.eq.s32.totalorder %s22, 0
      %p120 = por %p118, %p119
      %p121 = scmp.ne.s32.totalorder %s109, %s110
      %p122 = scmp.eq.s32.totalorder %s23, 1
      %p123 = por %p121, %p122
      %p125 = scmp.ne.s32.totalorder %s110, %s124
      %p126 = scmp.eq.s32.totalorder %s23, 0
      %p127 = por %p125, %p126
      %s128 = ssub.s32 %s24, %s36
      %s129 = ssub.s32 %s25, %s32
      %s130 = sor.u32 %s128, %s129
      %p131 = scmp.eq.s32.totalorder %s130, 0
      %s133 = sadd.s32 %s132, 1
      %s134 = scalar_select %p131, %s132, %s133
      %p137 = pneg %p131
      %p138 = scmp.eq.s32.totalorder %s17, 1
      %p139 = por %p137, %p138
      %p140 = scmp.ne.s32.totalorder %s132, %s135
      %p141 = scmp.eq.s32.totalorder %s17, 0
      %p142 = por %p140, %p141
      %p143 = scmp.ne.s32.totalorder %s132, %s135
      %p144 = scmp.eq.s32.totalorder %s22, 1
      %p145 = por %p143, %p144
      %p146 = scmp.ne.s32.totalorder %s135, %s136
      %p147 = scmp.eq.s32.totalorder %s22, 0
      %p148 = por %p146, %p147
      %p149 = scmp.ne.s32.totalorder %s135, %s136
      %p150 = scmp.eq.s32.totalorder %s23, 1
      %p151 = por %p149, %p150
      %p153 = scmp.ne.s32.totalorder %s136, %s152
      %p154 = scmp.eq.s32.totalorder %s23, 0
      %p155 = por %p153, %p154
      %p156 = scmp.le.s32.totalorder 1, %s17
      %p157 = scmp.lt.s32.totalorder %s17, 3
      %p158 = pnand %p156, %p157
      %p159 = pneg %p158
      // Predicated region
      $region9: #{tpu_custom_call.1} parent=5 // pred_check
        _
      $region10: #{tpu_custom_call.1} parent=5 // pred_check_branch
        %161 = sbr.rel (%p158) target = $region12
      $region11: #{tpu_custom_call.1} parent=5 // pred_region
        %s162 = ssub.s32 %s17, 1
        // Predicated region
        $region13: #{tpu_custom_call.1} parent=11 // pred_check
          %p163 = pneg %p78
        $region14: #{tpu_custom_call.1} parent=11 // pred_check_branch
          %165 = sbr.rel (%p163) target = $region16
        $region15: #{tpu_custom_call.1} parent=11 // pred_region
          %167 = vsyncadd [#allocation6], 0
          %s168 = sshll.u32 %s1, 4
          %s169 = int_to_ptr.hbm [resolvable:$true] %s168
          %s170 = sshll.u32 [#allocation5], 4
          %s171 = int_to_ptr.vmem [resolvable:$true] %s170
          %176 = dma.hbm_to_vmem [thread:$0]  %s169, 1024, %s171, [#allocation6], 64, 64, 4
        $region16: #{tpu_custom_call.1} parent=11 // pred_fallthru
          _
        // Predicated region
        $region17: #{tpu_custom_call.1} parent=11 // pred_check
          %p177 = pneg %p99
        $region18: #{tpu_custom_call.1} parent=11 // pred_check_branch
          %179 = sbr.rel (%p177) target = $region20
        $region19: #{tpu_custom_call.1} parent=11 // pred_region
          _
        $region20: #{tpu_custom_call.1} parent=11 // pred_fallthru
          _
        // Predicated region
        $region21: #{tpu_custom_call.1} parent=11 // pred_check
          %p180 = pneg %p120
        $region22: #{tpu_custom_call.1} parent=11 // pred_check_branch
          %182 = sbr.rel (%p180) target = $region24
        $region23: #{tpu_custom_call.1} parent=11 // pred_region
          _
        $region24: #{tpu_custom_call.1} parent=11 // pred_fallthru
          _
      $region12: #{tpu_custom_call.1} parent=5 // pred_fallthru
        _
      %p183 = scmp.lt.s32.totalorder %s17, 2
      // Predicated region
      $region25: #{tpu_custom_call.1} parent=5 // pred_check
        %p184 = pneg %p183
      $region26: #{tpu_custom_call.1} parent=5 // pred_check_branch
        %186 = sbr.rel (%p184) target = $region28
      $region27: #{tpu_custom_call.1} parent=5 // pred_region
        // Predicated region
        $region29: #{tpu_custom_call.1} parent=27 // pred_check
          %p187 = pneg %p51
        $region30: #{tpu_custom_call.1} parent=27 // pred_check_branch
          %189 = sbr.rel (%p187) target = $region32
        $region31: #{tpu_custom_call.1} parent=27 // pred_region
          %s190 = sand.u32 %s41, 1
          %s191 = scalar_lea.sflag [#allocation3], %s190
          %s192 = sand.u32 %s41, 1
          %s193 = smul.addr %s192, 128
          %s194 = scalar_lea.vmem [#allocation2], %s193
          %s195 = smul.u32 32, %s25
          %197 = vsyncadd %s191, 0
          %s198 = smul.addr %s24, 32
          %s199 = sadd.s32 %s195, %s198
          %s200 = smul.addr %s199, 4
          %s201 = scalar_lea.hbm %s0, %s200
          %s202 = sshll.u32 %s201, 4
          %s203 = int_to_ptr.hbm [resolvable:$true] %s202
          %s204 = sshll.u32 %s194, 4
          %s205 = int_to_ptr.vmem [resolvable:$true] %s204
          %210 = dma.hbm_to_vmem [thread:$0]  %s203, 2048, %s205, %s191, 64, 64, 4
        $region32: #{tpu_custom_call.1} parent=27 // pred_fallthru
          _
      $region28: #{tpu_custom_call.1} parent=5 // pred_fallthru
        _
      %p211 = scmp.le.s32.totalorder 1, %s17
      %p212 = scmp.lt.s32.totalorder %s17, 3
      %p213 = pnand %p211, %p212
      %p214 = pneg %p213
      // Predicated region
      $region33: #{tpu_custom_call.1} parent=5 // pred_check
        _
      $region34: #{tpu_custom_call.1} parent=5 // pred_check_branch
        %216 = sbr.rel (%p213) target = $region36
      $region35: #{tpu_custom_call.1} parent=5 // pred_region
        %s217 = ssub.s32 %s17, 1
        %s218 = sand.u32 %s44, 1
        %s219 = scalar_lea.sflag [#allocation3], %s218
        %s220 = sand.u32 %s44, 1
        %s221 = smul.addr %s220, 128
        %s222 = scalar_lea.vmem [#allocation2], %s221
        // Predicated region
        $region37: #{tpu_custom_call.1} parent=35 // pred_check
          %p223 = pneg %p57
        $region38: #{tpu_custom_call.1} parent=35 // pred_check_branch
          %225 = sbr.rel (%p223) target = $region40
        $region39: #{tpu_custom_call.1} parent=35 // pred_region
          %227 = dma.done %s219, 2048
        $region40: #{tpu_custom_call.1} parent=35 // pred_fallthru
          _
        // Predicated region
        $region41: #{tpu_custom_call.1} parent=35 // pred_check
          %p228 = pneg %p78
        $region42: #{tpu_custom_call.1} parent=35 // pred_check_branch
          %230 = sbr.rel (%p228) target = $region44
        $region43: #{tpu_custom_call.1} parent=35 // pred_region
          %232 = dma.done [#allocation6], 1024
        $region44: #{tpu_custom_call.1} parent=35 // pred_fallthru
          _
        %s233 = sand.u32 %s44, 1
        %s234 = scalar_lea.sflag [#allocation3], %s233
        %s235 = sand.u32 %s44, 1
        %s236 = smul.addr %s235, 128
        %s237 = scalar_lea.vmem [#allocation2], %s236
        %p238 = pneg %p57
        %p239 = pneg %p54
        %p240 = pneg %p78
        %p241 = pneg %p75
        %p242 = pneg %p99
        %p243 = pneg %p96
        %p244 = pneg %p120
        %p245 = pneg %p117
        %p246 = pneg %p148
        %p247 = pneg %p145
        %s248 = sand.u32 %s135, 1
        %s249 = scalar_lea.sflag [#allocation4], %s248
        %s250 = sand.u32 %s135, 1
        %s251 = smul.addr %s250, 128
        %s252 = scalar_lea.vmem [#allocation7], %s251
        %s253 = smul.u32 32, %s27
        %s254 = smul.u32 32, %s27
        %v255 = vld [vmem:[%s222] sm:$0xf]
        %v256 = vld [vmem:[%s222 + $0x4] sm:$0xf]
        %v257 = vld [vmem:[%s222 + $0x8] sm:$0xf]
        %v258 = vld [vmem:[%s222 + $0xc] sm:$0xf]
        %v259 = vld [vmem:[%s222 + $0x10] sm:$0xf]
        %v260 = vld [vmem:[%s222 + $0x14] sm:$0xf]
        %v261 = vld [vmem:[%s222 + $0x18] sm:$0xf]
        %v262 = vld [vmem:[%s222 + $0x1c] sm:$0xf]
        %v263 = vld [vmem:[%s222 + $0x20] sm:$0xf]
        %v264 = vld [vmem:[%s222 + $0x24] sm:$0xf]
        %v265 = vld [vmem:[%s222 + $0x28] sm:$0xf]
        %v266 = vld [vmem:[%s222 + $0x2c] sm:$0xf]
        %v267 = vld [vmem:[%s222 + $0x30] sm:$0xf]
        %v268 = vld [vmem:[%s222 + $0x34] sm:$0xf]
        %v269 = vld [vmem:[%s222 + $0x38] sm:$0xf]
        %v270 = vld [vmem:[%s222 + $0x3c] sm:$0xf]
        %v271 = vld [vmem:[%s222 + $0x40] sm:$0xf]
        %v272 = vld [vmem:[%s222 + $0x44] sm:$0xf]
        %v273 = vld [vmem:[%s222 + $0x48] sm:$0xf]
        %v274 = vld [vmem:[%s222 + $0x4c] sm:$0xf]
        %v275 = vld [vmem:[%s222 + $0x50] sm:$0xf]
        %v276 = vld [vmem:[%s222 + $0x54] sm:$0xf]
        %v277 = vld [vmem:[%s222 + $0x58] sm:$0xf]
        %v278 = vld [vmem:[%s222 + $0x5c] sm:$0xf]
        %v279 = vld [vmem:[%s222 + $0x60] sm:$0xf]
        %v280 = vld [vmem:[%s222 + $0x64] sm:$0xf]
        %v281 = vld [vmem:[%s222 + $0x68] sm:$0xf]
        %v282 = vld [vmem:[%s222 + $0x6c] sm:$0xf]
        %v283 = vld [vmem:[%s222 + $0x70] sm:$0xf]
        %v284 = vld [vmem:[%s222 + $0x74] sm:$0xf]
        %v285 = vld [vmem:[%s222 + $0x78] sm:$0xf]
        %v286 = vld [vmem:[%s222 + $0x7c] sm:$0xf]
        %v287 = vld [vmem:[#allocation5] sm:$0xf]
        %v288 = vld [vmem:[#allocation5 + $0x4] sm:$0xf]
        %v289 = vld [vmem:[#allocation5 + $0x8] sm:$0xf]
        %v290 = vld [vmem:[#allocation5 + $0xc] sm:$0xf]
        %v291 = vld [vmem:[#allocation5 + $0x10] sm:$0xf]
        %v292 = vld [vmem:[#allocation5 + $0x14] sm:$0xf]
        %v293 = vld [vmem:[#allocation5 + $0x18] sm:$0xf]
        %v294 = vld [vmem:[#allocation5 + $0x1c] sm:$0xf]
        %v295 = vld [vmem:[#allocation5 + $0x20] sm:$0xf]
        %v296 = vld [vmem:[#allocation5 + $0x24] sm:$0xf]
        %v297 = vld [vmem:[#allocation5 + $0x28] sm:$0xf]
        %v298 = vld [vmem:[#allocation5 + $0x2c] sm:$0xf]
        %v299 = vld [vmem:[#allocation5 + $0x30] sm:$0xf]
        %v300 = vld [vmem:[#allocation5 + $0x34] sm:$0xf]
        %v301 = vld [vmem:[#allocation5 + $0x38] sm:$0xf]
        %v302 = vld [vmem:[#allocation5 + $0x3c] sm:$0xf]
        %v335 = vunpack.c.l.b16 %v255
        %v336 = vunpack.c.l.b16 %v256
        %v337 = vunpack.c.l.b16 %v257
        %v338 = vunpack.c.l.b16 %v258
        %v339 = vunpack.c.l.b16 %v259
        %v340 = vunpack.c.l.b16 %v260
        %v341 = vunpack.c.l.b16 %v261
        %v342 = vunpack.c.l.b16 %v262
        %v343 = vunpack.c.l.b16 %v263
        %v344 = vunpack.c.l.b16 %v264
        %v345 = vunpack.c.l.b16 %v265
        %v346 = vunpack.c.l.b16 %v266
        %v347 = vunpack.c.l.b16 %v267
        %v348 = vunpack.c.l.b16 %v268
        %v349 = vunpack.c.l.b16 %v269
        %v350 = vunpack.c.l.b16 %v270
        %v351 = vunpack.c.l.b16 %v271
        %v352 = vunpack.c.l.b16 %v272
        %v353 = vunpack.c.l.b16 %v273
        %v354 = vunpack.c.l.b16 %v274
        %v355 = vunpack.c.l.b16 %v275
        %v356 = vunpack.c.l.b16 %v276
        %v357 = vunpack.c.l.b16 %v277
        %v358 = vunpack.c.l.b16 %v278
        %v359 = vunpack.c.l.b16 %v279
        %v360 = vunpack.c.l.b16 %v280
        %v361 = vunpack.c.l.b16 %v281
        %v362 = vunpack.c.l.b16 %v282
        %v363 = vunpack.c.l.b16 %v283
        %v364 = vunpack.c.l.b16 %v284
        %v365 = vunpack.c.l.b16 %v285
        %v366 = vunpack.c.l.b16 %v286
        %v367 = vpack.c.b16 %v336, %v335
        %v368 = vpack.c.b16 %v338, %v337
        %v369 = vpack.c.b16 %v340, %v339
        %v370 = vpack.c.b16 %v342, %v341
        %v371 = vpack.c.b16 %v344, %v343
        %v372 = vpack.c.b16 %v346, %v345
        %v373 = vpack.c.b16 %v348, %v347
        %v374 = vpack.c.b16 %v350, %v349
        %v375 = vpack.c.b16 %v352, %v351
        %v376 = vpack.c.b16 %v354, %v353
        %v377 = vpack.c.b16 %v356, %v355
        %v378 = vpack.c.b16 %v358, %v357
        %v379 = vpack.c.b16 %v360, %v359
        %v380 = vpack.c.b16 %v362, %v361
        %v381 = vpack.c.b16 %v364, %v363
        %v382 = vpack.c.b16 %v366, %v365
        %v415 = vunpack.c.l.b16 %v287
        %v416 = vunpack.c.l.b16 %v288
        %v417 = vunpack.c.l.b16 %v289
        %v418 = vunpack.c.l.b16 %v290
        %v419 = vunpack.c.l.b16 %v291
        %v420 = vunpack.c.l.b16 %v292
        %v421 = vunpack.c.l.b16 %v293
        %v422 = vunpack.c.l.b16 %v294
        %v423 = vunpack.c.l.b16 %v295
        %v424 = vunpack.c.l.b16 %v296
        %v425 = vunpack.c.l.b16 %v297
        %v426 = vunpack.c.l.b16 %v298
        %v427 = vunpack.c.l.b16 %v299
        %v428 = vunpack.c.l.b16 %v300
        %v429 = vunpack.c.l.b16 %v301
        %v430 = vunpack.c.l.b16 %v302
        %v431 = vpack.c.b16 %v416, %v415
        %v432 = vpack.c.b16 %v418, %v417
        %v433 = vpack.c.b16 %v420, %v419
        %v434 = vpack.c.b16 %v422, %v421
        %v435 = vpack.c.b16 %v424, %v423
        %v436 = vpack.c.b16 %v426, %v425
        %v437 = vpack.c.b16 %v428, %v427
        %v438 = vpack.c.b16 %v430, %v429
        %447 = vmatpush.bf16.msra.mxu0 %v438
        %448 = vmatpush.bf16.msra.mxu0 %v437
        %449 = vmatpush.bf16.msra.mxu0 %v436
        %450 = vmatpush.bf16.msra.mxu0 %v435
        %451 = vmatpush.bf16.msra.mxu0 %v434
        %452 = vmatpush.bf16.msra.mxu0 %v433
        %453 = vmatpush.bf16.msra.mxu0 %v432
        %454 = vmatpush.bf16.msra.mxu0 %v431
        %455 = vmatmul.bf16.gmra.mxu0 %v367
        %v456 = vpop.f32.mrf.mxu0
        %v457 = vadd.f32 0.0, %v456
        %v458 = vpop.f32.mrf.mxu0
        %v459 = vadd.f32 0.0, %v458
        %460 = vmatmul.bf16.gmra.mxu0 %v368
        %v461 = vpop.f32.mrf.mxu0
        %v462 = vadd.f32 0.0, %v461
        %v463 = vpop.f32.mrf.mxu0
        %v464 = vadd.f32 0.0, %v463
        %465 = vmatmul.bf16.gmra.mxu0 %v369
        %v466 = vpop.f32.mrf.mxu0
        %v467 = vadd.f32 0.0, %v466
        %v468 = vpop.f32.mrf.mxu0
        %v469 = vadd.f32 0.0, %v468
        %470 = vmatmul.bf16.gmra.mxu0 %v370
        %v471 = vpop.f32.mrf.mxu0
        %v472 = vadd.f32 0.0, %v471
        %v473 = vpop.f32.mrf.mxu0
        %v474 = vadd.f32 0.0, %v473
        %475 = vmatmul.bf16.gmra.mxu0 %v371
        %v476 = vpop.f32.mrf.mxu0
        %v477 = vadd.f32 0.0, %v476
        %v478 = vpop.f32.mrf.mxu0
        %v479 = vadd.f32 0.0, %v478
        %480 = vmatmul.bf16.gmra.mxu0 %v372
        %v481 = vpop.f32.mrf.mxu0
        %v482 = vadd.f32 0.0, %v481
        %v483 = vpop.f32.mrf.mxu0
        %v484 = vadd.f32 0.0, %v483
        %485 = vmatmul.bf16.gmra.mxu0 %v373
        %v486 = vpop.f32.mrf.mxu0
        %v487 = vadd.f32 0.0, %v486
        %v488 = vpop.f32.mrf.mxu0
        %v489 = vadd.f32 0.0, %v488
        %490 = vmatmul.bf16.gmra.mxu0 %v374
        %v491 = vpop.f32.mrf.mxu0
        %v492 = vadd.f32 0.0, %v491
        %v493 = vpop.f32.mrf.mxu0
        %v494 = vadd.f32 0.0, %v493
        %495 = vmatmul.bf16.gmra.mxu0 %v375
        %v496 = vpop.f32.mrf.mxu0
        %v497 = vadd.f32 0.0, %v496
        %v498 = vpop.f32.mrf.mxu0
        %v499 = vadd.f32 0.0, %v498
        %500 = vmatmul.bf16.gmra.mxu0 %v376
        %v501 = vpop.f32.mrf.mxu0
        %v502 = vadd.f32 0.0, %v501
        %v503 = vpop.f32.mrf.mxu0
        %v504 = vadd.f32 0.0, %v503
        %505 = vmatmul.bf16.gmra.mxu0 %v377
        %v506 = vpop.f32.mrf.mxu0
        %v507 = vadd.f32 0.0, %v506
        %v508 = vpop.f32.mrf.mxu0
        %v509 = vadd.f32 0.0, %v508
        %510 = vmatmul.bf16.gmra.mxu0 %v378
        %v511 = vpop.f32.mrf.mxu0
        %v512 = vadd.f32 0.0, %v511
        %v513 = vpop.f32.mrf.mxu0
        %v514 = vadd.f32 0.0, %v513
        %515 = vmatmul.bf16.gmra.mxu0 %v379
        %v516 = vpop.f32.mrf.mxu0
        %v517 = vadd.f32 0.0, %v516
        %v518 = vpop.f32.mrf.mxu0
        %v519 = vadd.f32 0.0, %v518
        %520 = vmatmul.bf16.gmra.mxu0 %v380
        %v521 = vpop.f32.mrf.mxu0
        %v522 = vadd.f32 0.0, %v521
        %v523 = vpop.f32.mrf.mxu0
        %v524 = vadd.f32 0.0, %v523
        %525 = vmatmul.bf16.gmra.mxu0 %v381
        %v526 = vpop.f32.mrf.mxu0
        %v527 = vadd.f32 0.0, %v526
        %v528 = vpop.f32.mrf.mxu0
        %v529 = vadd.f32 0.0, %v528
        %530 = vmatmul.bf16.gmra.mxu0 %v382
        %v531 = vpop.f32.mrf.mxu0
        %v532 = vadd.f32 0.0, %v531
        %v533 = vpop.f32.mrf.mxu0
        %v534 = vadd.f32 0.0, %v533
        %535 = vdwg.mxu0
        %v536 = vld [vmem:[%s2] sm:$0x1]
        %v538 = vperm.slane %v536, 0
        %v540 = vmul.f32 %v457, %v538
        %v541 = vmul.f32 %v459, %v538
        %v542 = vmul.f32 %v462, %v538
        %v543 = vmul.f32 %v464, %v538
        %v544 = vmul.f32 %v467, %v538
        %v545 = vmul.f32 %v469, %v538
        %v546 = vmul.f32 %v472, %v538
        %v547 = vmul.f32 %v474, %v538
        %v548 = vmul.f32 %v477, %v538
        %v549 = vmul.f32 %v479, %v538
        %v550 = vmul.f32 %v482, %v538
        %v551 = vmul.f32 %v484, %v538
        %v552 = vmul.f32 %v487, %v538
        %v553 = vmul.f32 %v489, %v538
        %v554 = vmul.f32 %v492, %v538
        %v555 = vmul.f32 %v494, %v538
        %v556 = vmul.f32 %v497, %v538
        %v557 = vmul.f32 %v499, %v538
        %v558 = vmul.f32 %v502, %v538
        %v559 = vmul.f32 %v504, %v538
        %v560 = vmul.f32 %v507, %v538
        %v561 = vmul.f32 %v509, %v538
        %v562 = vmul.f32 %v512, %v538
        %v563 = vmul.f32 %v514, %v538
        %v564 = vmul.f32 %v517, %v538
        %v565 = vmul.f32 %v519, %v538
        %v566 = vmul.f32 %v522, %v538
        %v567 = vmul.f32 %v524, %v538
        %v568 = vmul.f32 %v527, %v538
        %v569 = vmul.f32 %v529, %v538
        %v570 = vmul.f32 %v532, %v538
        %v571 = vmul.f32 %v534, %v538
        %v572 = vld [vmem:[%s3] sm:$0x1]
        %v574 = vperm.slane %v572, 0
        %v576 = vadd.f32 %v540, %v574
        %v577 = vadd.f32 %v541, %v574
        %v578 = vadd.f32 %v542, %v574
        %v579 = vadd.f32 %v543, %v574
        %v580 = vadd.f32 %v544, %v574
        %v581 = vadd.f32 %v545, %v574
        %v582 = vadd.f32 %v546, %v574
        %v583 = vadd.f32 %v547, %v574
        %v584 = vadd.f32 %v548, %v574
        %v585 = vadd.f32 %v549, %v574
        %v586 = vadd.f32 %v550, %v574
        %v587 = vadd.f32 %v551, %v574
        %v588 = vadd.f32 %v552, %v574
        %v589 = vadd.f32 %v553, %v574
        %v590 = vadd.f32 %v554, %v574
        %v591 = vadd.f32 %v555, %v574
        %v592 = vadd.f32 %v556, %v574
        %v593 = vadd.f32 %v557, %v574
        %v594 = vadd.f32 %v558, %v574
        %v595 = vadd.f32 %v559, %v574
        %v596 = vadd.f32 %v560, %v574
        %v597 = vadd.f32 %v561, %v574
        %v598 = vadd.f32 %v562, %v574
        %v599 = vadd.f32 %v563, %v574
        %v600 = vadd.f32 %v564, %v574
        %v601 = vadd.f32 %v565, %v574
        %v602 = vadd.f32 %v566, %v574
        %v603 = vadd.f32 %v567, %v574
        %v604 = vadd.f32 %v568, %v574
        %v605 = vadd.f32 %v569, %v574
        %v606 = vadd.f32 %v570, %v574
        %v607 = vadd.f32 %v571, %v574
        %v608 = vmax.f32 %v576, 0.0
        %v609 = vmax.f32 %v577, 0.0
        %v610 = vmax.f32 %v578, 0.0
        %v611 = vmax.f32 %v579, 0.0
        %v612 = vmax.f32 %v580, 0.0
        %v613 = vmax.f32 %v581, 0.0
        %v614 = vmax.f32 %v582, 0.0
        %v615 = vmax.f32 %v583, 0.0
        %v616 = vmax.f32 %v584, 0.0
        %v617 = vmax.f32 %v585, 0.0
        %v618 = vmax.f32 %v586, 0.0
        %v619 = vmax.f32 %v587, 0.0
        %v620 = vmax.f32 %v588, 0.0
        %v621 = vmax.f32 %v589, 0.0
        %v622 = vmax.f32 %v590, 0.0
        %v623 = vmax.f32 %v591, 0.0
        %v624 = vmax.f32 %v592, 0.0
        %v625 = vmax.f32 %v593, 0.0
        %v626 = vmax.f32 %v594, 0.0
        %v627 = vmax.f32 %v595, 0.0
        %v628 = vmax.f32 %v596, 0.0
        %v629 = vmax.f32 %v597, 0.0
        %v630 = vmax.f32 %v598, 0.0
        %v631 = vmax.f32 %v599, 0.0
        %v632 = vmax.f32 %v600, 0.0
        %v633 = vmax.f32 %v601, 0.0
        %v634 = vmax.f32 %v602, 0.0
        %v635 = vmax.f32 %v603, 0.0
        %v636 = vmax.f32 %v604, 0.0
        %v637 = vmax.f32 %v605, 0.0
        %v638 = vmax.f32 %v606, 0.0
        %v639 = vmax.f32 %v607, 0.0
        %v640 = vpack.c.bf16 %v608, %v608
        %v641 = vpack.c.bf16 %v609, %v609
        %v642 = vpack.c.bf16 %v610, %v610
        %v643 = vpack.c.bf16 %v611, %v611
        %v644 = vpack.c.bf16 %v612, %v612
        %v645 = vpack.c.bf16 %v613, %v613
        %v646 = vpack.c.bf16 %v614, %v614
        %v647 = vpack.c.bf16 %v615, %v615
        %v648 = vpack.c.bf16 %v616, %v616
        %v649 = vpack.c.bf16 %v617, %v617
        %v650 = vpack.c.bf16 %v618, %v618
        %v651 = vpack.c.bf16 %v619, %v619
        %v652 = vpack.c.bf16 %v620, %v620
        %v653 = vpack.c.bf16 %v621, %v621
        %v654 = vpack.c.bf16 %v622, %v622
        %v655 = vpack.c.bf16 %v623, %v623
        %v656 = vpack.c.bf16 %v624, %v624
        %v657 = vpack.c.bf16 %v625, %v625
        %v658 = vpack.c.bf16 %v626, %v626
        %v659 = vpack.c.bf16 %v627, %v627
        %v660 = vpack.c.bf16 %v628, %v628
        %v661 = vpack.c.bf16 %v629, %v629
        %v662 = vpack.c.bf16 %v630, %v630
        %v663 = vpack.c.bf16 %v631, %v631
        %v664 = vpack.c.bf16 %v632, %v632
        %v665 = vpack.c.bf16 %v633, %v633
        %v666 = vpack.c.bf16 %v634, %v634
        %v667 = vpack.c.bf16 %v635, %v635
        %v668 = vpack.c.bf16 %v636, %v636
        %v669 = vpack.c.bf16 %v637, %v637
        %v670 = vpack.c.bf16 %v638, %v638
        %v671 = vpack.c.bf16 %v639, %v639
        %672 = vst [vmem:[%s252] sm:$0xf] %v640
        %673 = vst [vmem:[%s252 + $0x4] sm:$0xf] %v641
        %674 = vst [vmem:[%s252 + $0x8] sm:$0xf] %v642
        %675 = vst [vmem:[%s252 + $0xc] sm:$0xf] %v643
        %676 = vst [vmem:[%s252 + $0x10] sm:$0xf] %v644
        %677 = vst [vmem:[%s252 + $0x14] sm:$0xf] %v645
        %678 = vst [vmem:[%s252 + $0x18] sm:$0xf] %v646
        %679 = vst [vmem:[%s252 + $0x1c] sm:$0xf] %v647
        %680 = vst [vmem:[%s252 + $0x20] sm:$0xf] %v648
        %681 = vst [vmem:[%s252 + $0x24] sm:$0xf] %v649
        %682 = vst [vmem:[%s252 + $0x28] sm:$0xf] %v650
        %683 = vst [vmem:[%s252 + $0x2c] sm:$0xf] %v651
        %684 = vst [vmem:[%s252 + $0x30] sm:$0xf] %v652
        %685 = vst [vmem:[%s252 + $0x34] sm:$0xf] %v653
        %686 = vst [vmem:[%s252 + $0x38] sm:$0xf] %v654
        %687 = vst [vmem:[%s252 + $0x3c] sm:$0xf] %v655
        %688 = vst [vmem:[%s252 + $0x40] sm:$0xf] %v656
        %689 = vst [vmem:[%s252 + $0x44] sm:$0xf] %v657
        %690 = vst [vmem:[%s252 + $0x48] sm:$0xf] %v658
        %691 = vst [vmem:[%s252 + $0x4c] sm:$0xf] %v659
        %692 = vst [vmem:[%s252 + $0x50] sm:$0xf] %v660
        %693 = vst [vmem:[%s252 + $0x54] sm:$0xf] %v661
        %694 = vst [vmem:[%s252 + $0x58] sm:$0xf] %v662
        %695 = vst [vmem:[%s252 + $0x5c] sm:$0xf] %v663
        %696 = vst [vmem:[%s252 + $0x60] sm:$0xf] %v664
        %697 = vst [vmem:[%s252 + $0x64] sm:$0xf] %v665
        %698 = vst [vmem:[%s252 + $0x68] sm:$0xf] %v666
        %699 = vst [vmem:[%s252 + $0x6c] sm:$0xf] %v667
        %700 = vst [vmem:[%s252 + $0x70] sm:$0xf] %v668
        %701 = vst [vmem:[%s252 + $0x74] sm:$0xf] %v669
        %702 = vst [vmem:[%s252 + $0x78] sm:$0xf] %v670
        %703 = vst [vmem:[%s252 + $0x7c] sm:$0xf] %v671
        %s704 = sand.u32 %s135, 1
        %s705 = scalar_lea.sflag [#allocation4], %s704
        %s706 = sand.u32 %s135, 1
        %s707 = smul.addr %s706, 128
        %s708 = scalar_lea.vmem [#allocation7], %s707
        // Predicated region
        $region45: #{tpu_custom_call.1} parent=35 // pred_check
          %p709 = pneg %p145
        $region46: #{tpu_custom_call.1} parent=35 // pred_check_branch
          %711 = sbr.rel (%p709) target = $region48
        $region47: #{tpu_custom_call.1} parent=35 // pred_region
          %s712 = smul.u32 32, %s27
          %714 = vsyncadd %s705, 0
          %s715 = smul.addr %s26, 32
          %s716 = sadd.s32 %s712, %s715
          %s717 = smul.addr %s716, 4
          %s718 = scalar_lea.hbm %s4, %s717
          %s719 = sshll.u32 %s708, 4
          %s720 = int_to_ptr.vmem [resolvable:$true] %s719
          %s721 = sshll.u32 %s718, 4
          %s722 = int_to_ptr.hbm [resolvable:$true] %s721
          %727 = dma.vmem_to_hbm [thread:$0]  %s720, 2048, %s722, %s705, 64, 64, 4
        $region48: #{tpu_custom_call.1} parent=35 // pred_fallthru
          _
      $region36: #{tpu_custom_call.1} parent=5 // pred_fallthru
        _
      %p728 = scmp.le.s32.totalorder 2, %s17
      // Predicated region
      $region49: #{tpu_custom_call.1} parent=5 // pred_check
        %p729 = pneg %p728
      $region50: #{tpu_custom_call.1} parent=5 // pred_check_branch
        %731 = sbr.rel (%p729) target = $region52
      $region51: #{tpu_custom_call.1} parent=5 // pred_region
        %s732 = ssub.s32 %s17, 2
        // Predicated region
        $region53: #{tpu_custom_call.1} parent=51 // pred_check
          %p733 = pneg %p151
        $region54: #{tpu_custom_call.1} parent=51 // pred_check_branch
          %735 = sbr.rel (%p733) target = $region56
        $region55: #{tpu_custom_call.1} parent=51 // pred_region
          %s736 = sand.u32 %s136, 1
          %s737 = scalar_lea.sflag [#allocation4], %s736
          %s738 = sand.u32 %s136, 1
          %s739 = smul.addr %s738, 128
          %s740 = scalar_lea.vmem [#allocation7], %s739
          %742 = dma.done %s737, 2048
        $region56: #{tpu_custom_call.1} parent=51 // pred_fallthru
          _
      $region52: #{tpu_custom_call.1} parent=5 // pred_fallthru
        _
    $region6: #{tpu_custom_call.1} parent=1 // loop_footer
      %s21 = sadd.s32 1, %s17
    $region7: #{tpu_custom_call.1} parent=1 // loop_footer_branch
      %16 = sbr.rel target = $region3
    $region8: #{tpu_custom_call.1} parent=1 // loop_exit
      _
    %743 = vsyncpa [#allocation3], 1
    %s744 = scalar_lea.sflag [#allocation3], 1
    %745 = vsyncpa %s744, 1
    %746 = vsyncpa [#allocation6], 1
    %747 = vsyncpa [#allocation4], 1
    %s748 = scalar_lea.sflag [#allocation4], 1
    %749 = vsyncpa %s748, 1

</llo_original>
